<compile_context>
chip_gen: v7x
topology: tpu7x:2x2x1
jax: 0.10.0
libtpu: 0.0.40
codegen_flags: <defaults>
</compile_context>

<pallas_src>
import numpy as np
import jax
import jax.numpy as jnp
from jax.experimental import pallas as pl
from jax.experimental.pallas import tpu as pltpu


# ----------------------------- stft_setting ---------------------------------
# Deterministic, in-script "stft_setting" (no checkpoint / file loads).
N_FFT = 16
HOP = 4
WIN_LENGTH = 16
FREQ = N_FFT // 2 + 1  # onesided bins = 9


def _hann_window(win_length: int) -> np.ndarray:
    # torch.hann_window(win_length, periodic=True)
    n = np.arange(win_length)
    return (0.5 * (1.0 - np.cos(2.0 * np.pi * n / win_length))).astype(np.float64)


def _padded_window(n_fft: int, win_length: int) -> np.ndarray:
    win = _hann_window(win_length)
    pad_l = (n_fft - win_length) // 2
    win_p = np.zeros(n_fft, np.float64)
    win_p[pad_l:pad_l + win_length] = win
    return win_p


# ------------------------ banded per-block operator ---------------------------
def _build_block_operator(n_fft: int, hop: int, win_length: int, tb: int):
    """Fold framing + window + one-sided rDFT for a block of `tb` frames.

    Returns M (slab_len, Cb_pad) f32 such that for a slab of samples
    s[0:slab_len] (taken from the reflect-padded signal starting at the
    block's first frame), spec_flat = s @ M, where
    spec_flat[t_local*(2F) + 2*f + c] is the (re, im) STFT value of local
    frame t_local.  Cb_pad rounds 2*F*tb up to a multiple of 128.
    """
    F = n_fft // 2 + 1
    slab_len = (tb - 1) * hop + n_fft
    cb = tb * F * 2
    cb_pad = ((cb + 127) // 128) * 128

    win_p = _padded_window(n_fft, win_length)             # (N,)
    n = np.arange(n_fft)[:, None]                         # (N, 1)
    k = np.arange(F)[None, :]                             # (1, F)
    ang = 2.0 * np.pi * n * k / n_fft                     # (N, F)
    basis = np.empty((n_fft, F, 2), np.float64)
    basis[:, :, 0] = np.cos(ang) * win_p[:, None]         # real part
    basis[:, :, 1] = -np.sin(ang) * win_p[:, None]        # imag part

    M = np.zeros((slab_len, tb, F, 2), np.float64)
    for t in range(tb):                                   # tb iterations only
        M[t * hop:t * hop + n_fft, t, :, :] = basis
    M = M.reshape(slab_len, cb)
    if cb_pad != cb:
        M = np.concatenate([M, np.zeros((slab_len, cb_pad - cb), np.float64)],
                           axis=1)
    return M.astype(np.float32), slab_len, cb, cb_pad


_OP_CACHE = {}


def _get_block_operator(n_fft: int, hop: int, win_length: int, tb: int):
    """Device-resident operator, built once per (n_fft, hop, win_length, Tb)."""
    key = (n_fft, hop, win_length, tb)
    if key not in _OP_CACHE:
        M_np, slab_len, cb, cb_pad = _build_block_operator(n_fft, hop,
                                                           win_length, tb)
        _OP_CACHE[key] = (jnp.asarray(M_np), slab_len, cb, cb_pad)
    return _OP_CACHE[key]


# ------------------------------ tile choosers ---------------------------------
def _choose_frames_per_block(T: int, F: int) -> int:
    """Frames per block: lane-dense output (>=256 cols) but a small band."""
    if T <= 32:
        return T
    tb = -(-256 // (2 * F))                # ceil: >= 256 output lanes / block
    return int(min(64, max(8, tb), T))


def _choose_batch_block(B: int, slab_len: int, cb_pad: int,
                        budget_bytes: int = 24 * 1024 * 1024) -> int:
    """Batch rows per block from a VMEM budget (double-buffered tiles)."""
    fixed = 2 * 4 * slab_len * cb_pad              # constant operator (x2 worst case)
    per_row = 2 * 4 * (slab_len + cb_pad)          # double-buffered x + out tiles
    rows = (budget_bytes - fixed) // per_row
    rows = max(8, (int(rows) // 8) * 8)
    b_ceil8 = ((B + 7) // 8) * 8
    return int(min(256, rows, b_ceil8))


# ------------------------------- kernel --------------------------------------
def _stft_kernel(x_ref, m_ref, o_ref):
    # x_ref: (1, TB, slab_len)  overlapping sample slab for this frame block
    # m_ref: (slab_len, Cb_pad) shared banded STFT operator (lane-dense cols)
    # o_ref: (TB, Cb_pad)       flattened (t_local, f, re/im) spectra (+ pad cols)
    o_ref[...] = jnp.dot(x_ref[0], m_ref[...],
                         preferred_element_type=jnp.float32)


# ------------------------------- wrapper --------------------------------------
def stft_pallas(x, n_fft=N_FFT, hop=HOP, win_length=WIN_LENGTH):
    """x: (*batch_dims, waveform_length) -> (*batch_dims, F, T, 2), like the module."""
    batch_dims = x.shape[:-1]
    L = int(x.shape[-1])
    B = int(np.prod(batch_dims)) if batch_dims else 1
    F = n_fft // 2 + 1
    pad = n_fft // 2
    if L <= pad:
        raise ValueError("reflect padding requires waveform_length > n_fft // 2")

    Lp = L + 2 * pad
    T = (Lp - n_fft) // hop + 1

    # Frame-block tiling + shared banded operator (precomputed device array).
    Tb = _choose_frames_per_block(T, F)
    NBLK = -(-T // Tb)
    M, slab_len, Cb, Cb_pad = _get_block_operator(n_fft, hop, win_length, Tb)

    # Batch-block tiling from a VMEM budget.
    TB = _choose_batch_block(B, slab_len, Cb_pad)
    B_pad = -(-B // TB) * TB

    xf = x.reshape(B, L).astype(jnp.float32)
    if B_pad != B:
        xf = jnp.pad(xf, ((0, B_pad - B), (0, 0)))

    # Reflect padding (torch 'reflect', no edge duplication) done in the
    # wrapper; zero-pad the tail so the last frame block's slab is in-bounds.
    xp = jnp.pad(xf, ((0, 0), (pad, pad)), mode="reflect")
    Lp_need = (NBLK * Tb - 1) * hop + n_fft
    if Lp_need > Lp:
        xp = jnp.pad(xp, ((0, 0), (0, Lp_need - Lp)))

    # Overlapping slabs, one per frame block: (NBLK, B_pad, slab_len).
    slabs = jnp.stack(
        [xp[:, j * Tb * hop: j * Tb * hop + slab_len] for j in range(NBLK)],
        axis=0)

    gm = B_pad // TB
    cost = pl.CostEstimate(
        flops=int(2 * B_pad * NBLK * slab_len * Cb_pad),
        transcendentals=0,
        bytes_accessed=int(4 * (NBLK * B_pad * slab_len
                                + slab_len * Cb_pad
                                + B_pad * NBLK * Cb_pad)),
    )

    out = pl.pallas_call(
        _stft_kernel,
        out_shape=jax.ShapeDtypeStruct((B_pad, NBLK * Cb_pad), jnp.float32),
        grid=(gm, NBLK),
        in_specs=[
            # Overlapping sample slab for (batch block i, frame block j).
            pl.BlockSpec((1, TB, slab_len), lambda i, j: (j, i, 0)),
            # Shared banded operator: block index never changes -> fetched once.
            pl.BlockSpec((slab_len, Cb_pad), lambda i, j: (0, 0)),
        ],
        out_specs=pl.BlockSpec((TB, Cb_pad), lambda i, j: (i, j)),
        compiler_params=pltpu.CompilerParams(
            dimension_semantics=("parallel", "parallel"),
            vmem_limit_bytes=32 * 1024 * 1024,
        ),
        cost_estimate=cost,
    )(slabs, M)

    # Crop batch / lane / frame padding and rearrange to (B, F, T, 2).
    out = out.reshape(B_pad, NBLK, Cb_pad)[:B, :, :Cb]
    out = out.reshape(B, NBLK * Tb, F, 2)[:, :T]          # (B, T, F, 2)
    y = jnp.transpose(out, (0, 2, 1, 3))                  # (B, F, T, 2)
    return y.reshape(*batch_dims, F, T, 2)


# ----------------------------- pure reference ---------------------------------
def stft_ref(x_np, n_fft=N_FFT, hop=HOP, win_length=WIN_LENGTH):
    batch_dims = x_np.shape[:-1]
    L = x_np.shape[-1]
    B = int(np.prod(batch_dims)) if batch_dims else 1
    x = np.asarray(x_np, np.float64).reshape(B, L)

    pad = n_fft // 2
    xp = np.pad(x, ((0, 0), (pad, pad)), mode="reflect")
    win_p = _padded_window(n_fft, win_length)
    T = (xp.shape[1] - n_fft) // hop + 1

    frames = np.stack([xp[:, t * hop:t * hop + n_fft] for t in range(T)],
                      axis=1) * win_p[None, None, :]        # (B, T, N)
    spec = np.fft.rfft(frames, n=n_fft, axis=-1)            # (B, T, F)
    out = np.stack([spec.real, spec.imag], axis=-1)         # (B, T, F, 2)
    out = out.transpose(0, 2, 1, 3)                         # (B, F, T, 2)
    return out.reshape(*batch_dims, out.shape[1], out.shape[2], 2)


if __name__ == "__main__":
    key = jax.random.PRNGKey(0)
    batch, ch, L = 2, 4, 64
    x = jax.random.normal(key, (batch, ch, L), dtype=jnp.float32)

    y = stft_pallas(x)
    jax.block_until_ready(y)

    T = L // HOP + 1
    assert y.shape == (batch, ch, FREQ, T, 2), y.shape

    y_ref = stft_ref(np.asarray(x))
    np.testing.assert_allclose(np.asarray(y), y_ref, rtol=2e-4, atol=2e-4)

    print("KERNEL_OK")
</pallas_src>

<mosaic_0001>
module attributes {stable_mosaic.version = 11 : i64} {
  func.func @_stft_kernel(%arg0: i32, %arg1: i32, %arg2: memref<1x8x80xf32, #tpu.memory_space<vmem>>, %arg3: memref<80x384xf32, #tpu.memory_space<vmem>>, %arg4: memref<8x384xf32, #tpu.memory_space<vmem>>) attributes {dimension_semantics = [#tpu.dimension_semantics<parallel>, #tpu.dimension_semantics<parallel>], iteration_bounds = array<i64: 1, 1>, scalar_prefetch = 0 : i64, scratch_operands = 0 : i64, tpu.core_type = #tpu.core_type<tc>, window_params = [{transform_indices = @transform_0, window_bounds = array<i64: 1, 8, 80>}, {pipeline_mode = #tpu.pipeline_mode<synchronous>, transform_indices = @transform_1, window_bounds = array<i64: 80, 384>}, {transform_indices = @transform_2, window_bounds = array<i64: 8, 384>}]} {
    %c0 = arith.constant 0 : index
    %c0_0 = arith.constant 0 : index
    %c0_1 = arith.constant 0 : index
    %0 = vector.load %arg2[%c0, %c0_0, %c0_1] : memref<1x8x80xf32, #tpu.memory_space<vmem>>, vector<1x8x80xf32>
    %1 = vector.shape_cast %0 : vector<1x8x80xf32> to vector<8x80xf32>
    %c0_2 = arith.constant 0 : index
    %c0_3 = arith.constant 0 : index
    %2 = vector.load %arg3[%c0_2, %c0_3] : memref<80x384xf32, #tpu.memory_space<vmem>>, vector<80x384xf32>
    %cst = arith.constant dense<0.000000e+00> : vector<8x384xf32>
    %3 = tpu.matmul %1, %2, %cst {dimension_numbers = #tpu.dot_dimension_numbers<[1], [0], [0], [1], [0, 0, 1, 1], [], []>} : vector<8x80xf32>, vector<80x384xf32>, vector<8x384xf32> -> vector<8x384xf32>
    %c0_4 = arith.constant 0 : index
    %c0_5 = arith.constant 0 : index
    %4 = vector.load %arg4[%c0_4, %c0_5] : memref<8x384xf32, #tpu.memory_space<vmem>>, vector<8x384xf32>
    tpu.vector_store %arg4[%c0_4, %c0_5], %3 {strides = array<i32>} : memref<8x384xf32, #tpu.memory_space<vmem>>, vector<8x384xf32>,
    return
  }
  func.func @transform_0(%arg0: i32, %arg1: i32) -> (i32, i32, i32) {
    %c0_i32 = arith.constant 0 : i32
    %c0_i32_0 = arith.constant 0 : i32
    return %arg1, %arg0, %c0_i32 : i32, i32, i32
  }
  func.func @transform_1(%arg0: i32, %arg1: i32) -> (i32, i32) {
    %c0_i32 = arith.constant 0 : i32
    %c0_i32_0 = arith.constant 0 : i32
    %c0_i32_1 = arith.constant 0 : i32
    return %c0_i32, %c0_i32_0 : i32, i32
  }
  func.func @transform_2(%arg0: i32, %arg1: i32) -> (i32, i32) {
    %c0_i32 = arith.constant 0 : i32
    return %arg0, %arg1 : i32, i32
  }
}

</mosaic_0001>

<llo_original>
// kernel: tpu_custom_call.1
$region0: #{tpu_custom_call.1}
  #allocation0 [shape = 'u32[]', space=smem, size = 0x4, offset = 0x4, fixed_abs, tag = 'smem constant byte address 0x4 - core index']
  #allocation1 [shape = 'u32[144,128]{1,0:T(1,128)}', space=vmem, size = 0x12000, scoped, tag = 'internal scratch']
  %s0 = inlined_call_operand.hbm [shape: f32[1,8,80], index: 0, kind: input, shape index: {}]
  %s1 = inlined_call_operand.hbm [shape: f32[80,384], index: 1, kind: input, shape index: {}]
  %s2 = inlined_call_operand.hbm [shape: f32[8,384], index: 2, kind: output, shape index: {}]
  %s3 = sld [smem:[#allocation0]]
  $region26: #{tpu_custom_call.1} parent=0
    _
  %s5 = ssub.s32 1, %s3
  %s6 = scalar_select 0, %s5, %s3
  $region1: #{tpu_custom_call.1} parent=0
    #allocation2 [shape = 'u8[4096]{0}', space=vmem, size = 0x1000, scoped, tag = 'input window, operand 0, single buffered']
    #allocation3 [shape = 's32[1]{0}', space=sflag, size = 0x4, scoped, tag = 'scoped memory for tpu_custom_call.1']
    #allocation4 [shape = 's32[1]{0}', space=sflag, size = 0x4, scoped, tag = 'scoped memory for tpu_custom_call.1']
    #allocation5 [shape = 'u8[122880]{0}', space=vmem, size = 0x1e000, scoped, tag = 'input window, operand 1, single buffered']
    #allocation6 [shape = 's32[1]{0}', space=sflag, size = 0x4, scoped, tag = 'scoped memory for tpu_custom_call.1']
    #allocation7 [shape = 'u8[12288]{0}', space=vmem, size = 0x3000, scoped, tag = 'output window, operand 0, single buffered']
    %7 = vsyncpa [#allocation3], 0
    %8 = vsyncpa [#allocation6], 0
    %9 = vsyncpa [#allocation4], 0
    // Predicated region
    $region2: #{tpu_custom_call.1} parent=1 // pred_check
      _
    $region3: #{tpu_custom_call.1} parent=1 // pred_check_branch
      %11 = sbr.rel (0) target = $region5
    $region4: #{tpu_custom_call.1} parent=1 // pred_region
      %s13 = ssub.s32 128, 128
      %14 = vsyncadd [#allocation3], %s13
      %s16 = sshll.u32 [#allocation2], 4
      %s17 = int_to_ptr.vmem [resolvable:$true] %s16
      %19 = dma.hbm_to_vmem [thread:$0]  %s0, 128, %s17, [#allocation3]
    $region5: #{tpu_custom_call.1} parent=1 // pred_fallthru
      _
    // Predicated region
    $region6: #{tpu_custom_call.1} parent=1 // pred_check
      _
    $region7: #{tpu_custom_call.1} parent=1 // pred_check_branch
      %21 = sbr.rel (0) target = $region9
    $region8: #{tpu_custom_call.1} parent=1 // pred_region
      %s23 = ssub.s32 3840, 3840
      %24 = vsyncadd [#allocation6], %s23
      %s25 = sshll.u32 [#allocation5], 4
      %s26 = int_to_ptr.vmem [resolvable:$true] %s25
      %31 = dma.hbm_to_vmem [thread:$0]  %s1, 3840, %s26, [#allocation6], 384, 384, 24
    $region9: #{tpu_custom_call.1} parent=1 // pred_fallthru
      _
    // Predicated region
    $region10: #{tpu_custom_call.1} parent=1 // pred_check
      _
    $region11: #{tpu_custom_call.1} parent=1 // pred_check_branch
      %33 = sbr.rel (0) target = $region13
    $region12: #{tpu_custom_call.1} parent=1 // pred_region
      %34 = dma.done [#allocation3], 128
    $region13: #{tpu_custom_call.1} parent=1 // pred_fallthru
      _
    // Predicated region
    $region14: #{tpu_custom_call.1} parent=1 // pred_check
      _
    $region15: #{tpu_custom_call.1} parent=1 // pred_check_branch
      %36 = sbr.rel (0) target = $region17
    $region16: #{tpu_custom_call.1} parent=1 // pred_region
      %37 = dma.done [#allocation6], 3840
    $region17: #{tpu_custom_call.1} parent=1 // pred_fallthru
      _
    %v38 = vld [vmem:[#allocation2] sm:$0xff]
    %v39 = vld [vmem:[#allocation5] sm:$0xff]
    %v40 = vld [vmem:[#allocation5 + $0x8] sm:$0xff]
    %v41 = vld [vmem:[#allocation5 + $0x10] sm:$0xff]
    %v42 = vld [vmem:[#allocation5 + $0x18] sm:$0xff]
    %v43 = vld [vmem:[#allocation5 + $0x20] sm:$0xff]
    %v44 = vld [vmem:[#allocation5 + $0x28] sm:$0xff]
    %v45 = vld [vmem:[#allocation5 + $0x30] sm:$0xff]
    %v46 = vld [vmem:[#allocation5 + $0x38] sm:$0xff]
    %v47 = vld [vmem:[#allocation5 + $0x40] sm:$0xff]
    %v48 = vld [vmem:[#allocation5 + $0x48] sm:$0xff]
    %v49 = vld [vmem:[#allocation5 + $0x50] sm:$0xff]
    %v50 = vld [vmem:[#allocation5 + $0x58] sm:$0xff]
    %v51 = vld [vmem:[#allocation5 + $0x60] sm:$0xff]
    %v52 = vld [vmem:[#allocation5 + $0x68] sm:$0xff]
    %v53 = vld [vmem:[#allocation5 + $0x70] sm:$0xff]
    %v54 = vld [vmem:[#allocation5 + $0x78] sm:$0xff]
    %v55 = vld [vmem:[#allocation5 + $0x80] sm:$0xff]
    %v56 = vld [vmem:[#allocation5 + $0x88] sm:$0xff]
    %v57 = vld [vmem:[#allocation5 + $0x90] sm:$0xff]
    %v58 = vld [vmem:[#allocation5 + $0x98] sm:$0xff]
    %v59 = vld [vmem:[#allocation5 + $0xa0] sm:$0xff]
    %v60 = vld [vmem:[#allocation5 + $0xa8] sm:$0xff]
    %v61 = vld [vmem:[#allocation5 + $0xb0] sm:$0xff]
    %v62 = vld [vmem:[#allocation5 + $0xb8] sm:$0xff]
    %v63 = vld [vmem:[#allocation5 + $0xc0] sm:$0xff]
    %v64 = vld [vmem:[#allocation5 + $0xc8] sm:$0xff]
    %v65 = vld [vmem:[#allocation5 + $0xd0] sm:$0xff]
    %v66 = vld [vmem:[#allocation5 + $0xd8] sm:$0xff]
    %v67 = vld [vmem:[#allocation5 + $0xe0] sm:$0xff]
    %v68 = vld [vmem:[#allocation5 + $0xe8] sm:$0xff]
    %vm69 = vcmask 654336
    %v71 = vsel %vm69, %v38, 0
    %73 = vmatprep.subr.mxu0 %v40
    %74 = vmatpush1.msra.mxu0 %v39
    %75 = vmatprep.subr.mxu0 %v43
    %76 = vmatpush1.msra.mxu0 %v42
    %77 = vmatprep.subr.mxu0 %v46
    %78 = vmatpush1.msra.mxu0 %v45
    %79 = vmatprep.subr.mxu0 %v49
    %80 = vmatpush1.msra.mxu0 %v48
    %81 = vmatprep.subr.mxu0 %v52
    %82 = vmatpush1.msra.mxu0 %v51
    %83 = vmatprep.subr.mxu0 %v55
    %84 = vmatpush1.msra.mxu0 %v54
    %85 = vmatprep.subr.mxu0 %v58
    %86 = vmatpush1.msra.mxu0 %v57
    %87 = vmatprep.subr.mxu0 %v61
    %88 = vmatpush1.msra.mxu0 %v60
    %89 = vmatprep.subr.mxu0 %v64
    %90 = vmatpush1.msra.mxu0 %v63
    %91 = vmatprep.subr.mxu0 %v67
    %92 = vmatpush1.msra.mxu0 %v66
    %93 = vmatprep.subr.mxu0 0.0
    %94 = vmatpush1.msra.mxu0 0.0
    %95 = vmatprep.subr.mxu0 0.0
    %96 = vmatpush1.msra.mxu0 0.0
    %97 = vmatprep.subr.mxu0 0.0
    %98 = vmatpush1.msra.mxu0 0.0
    %99 = vmatprep.subr.mxu0 0.0
    %100 = vmatpush1.msra.mxu0 0.0
    %101 = vmatprep.subr.mxu0 0.0
    %102 = vmatpush1.msra.mxu0 0.0
    %103 = vmatprep.subr.mxu0 0.0
    %104 = vmatpush1.msra.mxu0 0.0
    %105 = vmatprep.subr.mxu0 0.0
    %106 = vmatpush1.msra.mxu0 0.0
    %107 = vmatprep.subr.mxu0 0.0
    %108 = vmatpush1.msra.mxu0 0.0
    %109 = vmatprep.subr.mxu0 0.0
    %110 = vmatpush1.msra.mxu0 0.0
    %111 = vmatprep.subr.mxu0 0.0
    %112 = vmatpush1.msra.mxu0 0.0
    %113 = vmatprep.subr.mxu0 0.0
    %114 = vmatpush1.msra.mxu0 0.0
    %115 = vmatprep.subr.mxu0 0.0
    %116 = vmatpush1.msra.mxu0 0.0
    %117 = vmatprep.subr.mxu0 0.0
    %118 = vmatpush1.msra.mxu0 0.0
    %119 = vmatprep.subr.mxu0 0.0
    %120 = vmatpush1.msra.mxu0 0.0
    %121 = vmatprep.subr.mxu0 0.0
    %122 = vmatpush1.msra.mxu0 0.0
    %123 = vmatprep.subr.mxu0 0.0
    %124 = vmatpush1.msra.mxu0 0.0
    %125 = vmatprep.subr.mxu0 0.0
    %126 = vmatpush1.msra.mxu0 0.0
    %127 = vmatprep.subr.mxu0 0.0
    %128 = vmatpush1.msra.mxu0 0.0
    %129 = vmatprep.subr.mxu0 0.0
    %130 = vmatpush1.msra.mxu0 0.0
    %131 = vmatprep.subr.mxu0 0.0
    %132 = vmatpush1.msra.mxu0 0.0
    %133 = vmatprep.subr.mxu0 0.0
    %134 = vmatpush1.msra.mxu0 0.0
    %135 = vmatprep.subr.mxu0 0.0
    %136 = vmatpush1.msra.mxu0 0.0
    %137 = vmatprep.mubr.f32.mxu0 0.0
    %138 = vmatmul.mubr.f32.gmra.mrb[0].mxu0 %v71
    %v139 = vpop.f32.mrb[0].mxu0
    %v140 = vadd.f32 0.0, %v139
    %v141 = vpop.f32.mrb[0].mxu0
    %v142 = vadd.f32 0.0, %v141
    %143 = vdwg.mxu0
    %144 = vmatprep.subr.mxu0 0.0
    %145 = vmatpush1.msra.mxu0 %v41
    %146 = vmatprep.subr.mxu0 0.0
    %147 = vmatpush1.msra.mxu0 %v44
    %148 = vmatprep.subr.mxu0 0.0
    %149 = vmatpush1.msra.mxu0 %v47
    %150 = vmatprep.subr.mxu0 0.0
    %151 = vmatpush1.msra.mxu0 %v50
    %152 = vmatprep.subr.mxu0 0.0
    %153 = vmatpush1.msra.mxu0 %v53
    %154 = vmatprep.subr.mxu0 0.0
    %155 = vmatpush1.msra.mxu0 %v56
    %156 = vmatprep.subr.mxu0 0.0
    %157 = vmatpush1.msra.mxu0 %v59
    %158 = vmatprep.subr.mxu0 0.0
    %159 = vmatpush1.msra.mxu0 %v62
    %160 = vmatprep.subr.mxu0 0.0
    %161 = vmatpush1.msra.mxu0 %v65
    %162 = vmatprep.subr.mxu0 0.0
    %163 = vmatpush1.msra.mxu0 %v68
    %164 = vmatprep.subr.mxu0 0.0
    %165 = vmatpush1.msra.mxu0 0.0
    %166 = vmatprep.subr.mxu0 0.0
    %167 = vmatpush1.msra.mxu0 0.0
    %168 = vmatprep.subr.mxu0 0.0
    %169 = vmatpush1.msra.mxu0 0.0
    %170 = vmatprep.subr.mxu0 0.0
    %171 = vmatpush1.msra.mxu0 0.0
    %172 = vmatprep.subr.mxu0 0.0
    %173 = vmatpush1.msra.mxu0 0.0
    %174 = vmatprep.subr.mxu0 0.0
    %175 = vmatpush1.msra.mxu0 0.0
    %176 = vmatprep.subr.mxu0 0.0
    %177 = vmatpush1.msra.mxu0 0.0
    %178 = vmatprep.subr.mxu0 0.0
    %179 = vmatpush1.msra.mxu0 0.0
    %180 = vmatprep.subr.mxu0 0.0
    %181 = vmatpush1.msra.mxu0 0.0
    %182 = vmatprep.subr.mxu0 0.0
    %183 = vmatpush1.msra.mxu0 0.0
    %184 = vmatprep.subr.mxu0 0.0
    %185 = vmatpush1.msra.mxu0 0.0
    %186 = vmatprep.subr.mxu0 0.0
    %187 = vmatpush1.msra.mxu0 0.0
    %188 = vmatprep.subr.mxu0 0.0
    %189 = vmatpush1.msra.mxu0 0.0
    %190 = vmatprep.subr.mxu0 0.0
    %191 = vmatpush1.msra.mxu0 0.0
    %192 = vmatprep.subr.mxu0 0.0
    %193 = vmatpush1.msra.mxu0 0.0
    %194 = vmatprep.subr.mxu0 0.0
    %195 = vmatpush1.msra.mxu0 0.0
    %196 = vmatprep.subr.mxu0 0.0
    %197 = vmatpush1.msra.mxu0 0.0
    %198 = vmatprep.subr.mxu0 0.0
    %199 = vmatpush1.msra.mxu0 0.0
    %200 = vmatprep.subr.mxu0 0.0
    %201 = vmatpush1.msra.mxu0 0.0
    %202 = vmatprep.subr.mxu0 0.0
    %203 = vmatpush1.msra.mxu0 0.0
    %204 = vmatprep.subr.mxu0 0.0
    %205 = vmatpush1.msra.mxu0 0.0
    %206 = vmatprep.subr.mxu0 0.0
    %207 = vmatpush1.msra.mxu0 0.0
    %208 = vmatprep.mubr.f32.mxu0 0.0
    %209 = vmatmul.mubr.f32.gmra.mrb[0].mxu0 %v71
    %v210 = vpop.f32.mrb[0].mxu0
    %v211 = vadd.f32 0.0, %v210
    %v212 = vpop.f32.mrb[0].mxu0
    %213 = vdwg.mxu0
    %214 = vst [vmem:[#allocation7] sm:$0xff] %v140
    %215 = vst [vmem:[#allocation7 + $0x8] sm:$0xff] %v142
    %216 = vst [vmem:[#allocation7 + $0x10] sm:$0xff] %v211
    // Predicated region
    $region18: #{tpu_custom_call.1} parent=1 // pred_check
      _
    $region19: #{tpu_custom_call.1} parent=1 // pred_check_branch
      %218 = sbr.rel (0) target = $region21
    $region20: #{tpu_custom_call.1} parent=1 // pred_region
      %s220 = ssub.s32 384, 384
      %221 = vsyncadd [#allocation4], %s220
      %s223 = sshll.u32 [#allocation7], 4
      %s224 = int_to_ptr.vmem [resolvable:$true] %s223
      %226 = dma.vmem_to_hbm [thread:$0]  %s224, 384, %s2, [#allocation4]
    $region21: #{tpu_custom_call.1} parent=1 // pred_fallthru
      _
    // Predicated region
    $region22: #{tpu_custom_call.1} parent=1 // pred_check
      _
    $region23: #{tpu_custom_call.1} parent=1 // pred_check_branch
      %228 = sbr.rel (0) target = $region25
    $region24: #{tpu_custom_call.1} parent=1 // pred_region
      %229 = dma.done [#allocation4], 384
    $region25: #{tpu_custom_call.1} parent=1 // pred_fallthru
      _
    %230 = vsyncpa [#allocation3], 1
    %231 = vsyncpa [#allocation6], 1
    %232 = vsyncpa [#allocation4], 1

</llo_original>
